<compile_context>
chip_gen: v7x
topology: tpu7x:2x2x1
jax: 0.10.0
libtpu: 0.0.40
codegen_flags: <defaults>
</compile_context>

<pallas_src>
import jax
import jax.numpy as jnp
from jax.experimental import pallas as pl
from jax.experimental.pallas import tpu as pltpu  # noqa: F401  (kept for TPU-specific tuning hooks)


def _mul_pwconv_kernel(s_ref, w_ref, x_ref, o_ref):
    # s_ref: (1, Cin) f32   w_ref: (Cout, Cin) bf16   x_ref: (Cin, HW) f32
    # o_ref: (Cout, HW) f32
    # Scale the *weight* (Cout*Cin elems) rather than the activation (Cin*HW elems):
    # identical math, fewer VPU multiplies.  Runs exactly once (single grid step).
    ws = w_ref[...].astype(jnp.float32) * s_ref[...]                 # VPU
    o_ref[...] = jnp.dot(
        ws, x_ref[...], preferred_element_type=jnp.float32
    ).astype(o_ref.dtype)                                            # MXU, f32 accumulate


@jax.jit
def mul_conv2d_1x1(x_nchw, scale_nc11, weight_oc):
    """conv2d_1x1(scale * x), bias-free, matching the PyTorch module.

    x_nchw:     (N, Cin, H, W)   f32 activations
    scale_nc11: (N, Cin, 1, 1)   f32 per-channel scale
    weight_oc:  (Cout, Cin)      conv weight (bf16 or f32), 1x1 kernel squeezed
    returns:    (N, Cout, H, W)  f32
    """
    N, Cin, H, W = x_nchw.shape
    Cout = weight_oc.shape[0]
    assert scale_nc11.shape == (N, Cin, 1, 1)
    assert weight_oc.shape == (Cout, Cin)
    assert N == 1  # module is defined for batch 1 (per-channel scale broadcast)

    HW = H * W
    # Pure reshapes only -- no NCHW<->NHWC transposes, no extra HBM round trips.
    x_flat = x_nchw.reshape(Cin, HW)          # (Cin, HW)
    scale = scale_nc11.reshape(1, Cin)        # (1, Cin)

    flops = 2 * Cout * Cin * HW
    bytes_accessed = (
        x_flat.size * x_flat.dtype.itemsize
        + scale.size * scale.dtype.itemsize
        + weight_oc.size * weight_oc.dtype.itemsize
        + Cout * HW * x_nchw.dtype.itemsize
    )

    # Single grid step: full-array blocks everywhere (all ~1 MB fits VMEM easily),
    # no dimension_semantics / megacore split needed at this size.
    out_flat = pl.pallas_call(
        _mul_pwconv_kernel,
        out_shape=jax.ShapeDtypeStruct((Cout, HW), x_nchw.dtype),
        in_specs=[
            pl.BlockSpec((1, Cin), lambda: (0, 0)),       # scale
            pl.BlockSpec((Cout, Cin), lambda: (0, 0)),    # weight (bf16)
            pl.BlockSpec((Cin, HW), lambda: (0, 0)),      # activations
        ],
        out_specs=pl.BlockSpec((Cout, HW), lambda: (0, 0)),
        cost_estimate=pl.CostEstimate(
            flops=flops, transcendentals=0, bytes_accessed=bytes_accessed
        ),
    )(scale, weight_oc, x_flat)

    return out_flat.reshape(N, Cout, H, W)


if __name__ == "__main__":
    # Shapes from the module: x328:[1,864,14,14], x333:[1,864,1,1],
    # conv2d107: 864 -> 144, 1x1, no bias.
    N, Cin, Cout, H, W = 1, 864, 144, 14, 14

    key = jax.random.PRNGKey(0)
    k1, k2, k3 = jax.random.split(key, 3)
    x328 = jax.random.normal(k1, (N, Cin, H, W), dtype=jnp.float32)
    x333 = jax.random.normal(k2, (N, Cin, 1, 1), dtype=jnp.float32)
    # Deterministic "parameter" init for the conv weight (no checkpoint load).
    w_conv_f32 = jax.random.normal(k3, (Cout, Cin, 1, 1), dtype=jnp.float32) * 0.02
    # Parameter-time (one-off) bf16 cast: halves the weight's HBM bytes on every call.
    w_param = w_conv_f32.reshape(Cout, Cin).astype(jnp.bfloat16)

    out = mul_conv2d_1x1(x328, x333, w_param)
    out = jax.block_until_ready(out)

    # Reference check (pure JAX) against the module's semantics, using the same
    # bf16-stored parameter so the tolerance check stays meaningful.
    x334 = x333 * x328
    w_ref = w_param.astype(jnp.float32).reshape(Cout, Cin, 1, 1)
    ref = jax.lax.conv_general_dilated(
        x334, w_ref, window_strides=(1, 1), padding="VALID",
        dimension_numbers=("NCHW", "OIHW", "NCHW"),
    )
    assert out.shape == (N, Cout, H, W)
    assert jnp.allclose(out, ref, atol=2e-3, rtol=2e-3)

    print("KERNEL_OK")
</pallas_src>

<mosaic_0001>
module attributes {stable_mosaic.version = 11 : i64} {
  func.func @_mul_pwconv_kernel(%arg0: memref<1x864xf32, #tpu.memory_space<vmem>>, %arg1: memref<144x864xbf16, #tpu.memory_space<vmem>>, %arg2: memref<864x196xf32, #tpu.memory_space<vmem>>, %arg3: memref<144x196xf32, #tpu.memory_space<vmem>>) attributes {dimension_semantics = [], scalar_prefetch = 0 : i64, scratch_operands = 0 : i64, tpu.core_type = #tpu.core_type<tc>} {
    %c0 = arith.constant 0 : index
    %c0_0 = arith.constant 0 : index
    %0 = vector.load %arg1[%c0, %c0_0] : memref<144x864xbf16, #tpu.memory_space<vmem>>, vector<144x864xbf16>
    %1 = arith.extf %0 : vector<144x864xbf16> to vector<144x864xf32>
    %c0_1 = arith.constant 0 : index
    %c0_2 = arith.constant 0 : index
    %2 = vector.load %arg0[%c0_1, %c0_2] : memref<1x864xf32, #tpu.memory_space<vmem>>, vector<1x864xf32>
    %3 = vector.broadcast %2 : vector<1x864xf32> to vector<144x864xf32>
    %4 = arith.mulf %1, %3 : vector<144x864xf32>
    %c0_3 = arith.constant 0 : index
    %c0_4 = arith.constant 0 : index
    %5 = vector.load %arg2[%c0_3, %c0_4] : memref<864x196xf32, #tpu.memory_space<vmem>>, vector<864x196xf32>
    %cst = arith.constant dense<0.000000e+00> : vector<144x196xf32>
    %6 = tpu.matmul %4, %5, %cst {dimension_numbers = #tpu.dot_dimension_numbers<[1], [0], [0], [1], [0, 0, 1, 1], [], []>} : vector<144x864xf32>, vector<864x196xf32>, vector<144x196xf32> -> vector<144x196xf32>
    %c0_5 = arith.constant 0 : index
    %c0_6 = arith.constant 0 : index
    %7 = vector.load %arg3[%c0_5, %c0_6] : memref<144x196xf32, #tpu.memory_space<vmem>>, vector<144x196xf32>
    tpu.vector_store %arg3[%c0_5, %c0_6], %6 {strides = array<i32>} : memref<144x196xf32, #tpu.memory_space<vmem>>, vector<144x196xf32>,
    return
  }
}

</mosaic_0001>

<llo_original>
// kernel: mul_conv2d_1x1.1
$region0: #{mul_conv2d_1x1.1}
  #allocation0 [shape = 'u32[]', space=smem, size = 0x4, offset = 0x4, fixed_abs, tag = 'smem constant byte address 0x4 - core index']
  #allocation1 [shape = 'u32[144,128]{1,0:T(1,128)}', space=vmem, size = 0x12000, scoped, tag = 'internal scratch']
  %s0 = inlined_call_operand.vmem [shape: f32[1,864], index: 0, kind: input, shape index: {}]
  %s1 = inlined_call_operand.vmem [shape: bf16[144,864], index: 1, kind: input, shape index: {}]
  %s2 = inlined_call_operand.vmem [shape: f32[864,196], index: 2, kind: input, shape index: {}]
  %s3 = inlined_call_operand.vmem [shape: f32[144,196], index: 3, kind: output, shape index: {}]
  %s4 = sld [smem:[#allocation0]]
  $region22: #{mul_conv2d_1x1.1} parent=0
    _
  %s6 = ssub.s32 1, %s4
  %s7 = scalar_select 0, %s6, %s4
  // Predicated region
  $region2: #{mul_conv2d_1x1.1} parent=0 // pred_check
    _
  $region3: #{mul_conv2d_1x1.1} parent=0 // pred_check_branch
    %9 = sbr.rel (0) target = $region5
  $region4: #{mul_conv2d_1x1.1} parent=0 // pred_region
    _
  $region5: #{mul_conv2d_1x1.1} parent=0 // pred_fallthru
    _
  // Predicated region
  $region6: #{mul_conv2d_1x1.1} parent=0 // pred_check
    _
  $region7: #{mul_conv2d_1x1.1} parent=0 // pred_check_branch
    %11 = sbr.rel (0) target = $region9
  $region8: #{mul_conv2d_1x1.1} parent=0 // pred_region
    _
  $region9: #{mul_conv2d_1x1.1} parent=0 // pred_fallthru
    _
  // Predicated region
  $region10: #{mul_conv2d_1x1.1} parent=0 // pred_check
    _
  $region11: #{mul_conv2d_1x1.1} parent=0 // pred_check_branch
    %13 = sbr.rel (0) target = $region13
  $region12: #{mul_conv2d_1x1.1} parent=0 // pred_region
    _
  $region13: #{mul_conv2d_1x1.1} parent=0 // pred_fallthru
    _
  %v14 = vld [vmem:[%s1] sm:$0xff]
  %v15 = vld [vmem:[%s1 + $0x8] sm:$0xff]
  %v16 = vld [vmem:[%s1 + $0x10] sm:$0xff]
  %v17 = vld [vmem:[%s1 + $0x18] sm:$0xf]
  %v18 = vld [vmem:[%s1 + $0x1c] sm:$0xff]
  %v19 = vld [vmem:[%s1 + $0x24] sm:$0xff]
  %v20 = vld [vmem:[%s1 + $0x2c] sm:$0xff]
  %v21 = vld [vmem:[%s1 + $0x34] sm:$0xf]
  %v22 = vld [vmem:[%s1 + $0x38] sm:$0xff]
  %v23 = vld [vmem:[%s1 + $0x40] sm:$0xff]
  %v24 = vld [vmem:[%s1 + $0x48] sm:$0xff]
  %v25 = vld [vmem:[%s1 + $0x50] sm:$0xf]
  %v26 = vld [vmem:[%s1 + $0x54] sm:$0xff]
  %v27 = vld [vmem:[%s1 + $0x5c] sm:$0xff]
  %v28 = vld [vmem:[%s1 + $0x64] sm:$0xff]
  %v29 = vld [vmem:[%s1 + $0x6c] sm:$0xf]
  %v30 = vld [vmem:[%s1 + $0x70] sm:$0xff]
  %v31 = vld [vmem:[%s1 + $0x78] sm:$0xff]
  %v32 = vld [vmem:[%s1 + $0x80] sm:$0xff]
  %v33 = vld [vmem:[%s1 + $0x88] sm:$0xf]
  %v34 = vld [vmem:[%s1 + $0x8c] sm:$0xff]
  %v35 = vld [vmem:[%s1 + $0x94] sm:$0xff]
  %v36 = vld [vmem:[%s1 + $0x9c] sm:$0xff]
  %v37 = vld [vmem:[%s1 + $0xa4] sm:$0xf]
  %v38 = vld [vmem:[%s1 + $0xa8] sm:$0xff]
  %v39 = vld [vmem:[%s1 + $0xb0] sm:$0xff]
  %v40 = vld [vmem:[%s1 + $0xb8] sm:$0xff]
  %v41 = vld [vmem:[%s1 + $0xc0] sm:$0xf]
  %v42 = vld [vmem:[%s1 + $0xc4] sm:$0xff]
  %v43 = vld [vmem:[%s1 + $0xcc] sm:$0xff]
  %v44 = vld [vmem:[%s1 + $0xd4] sm:$0xff]
  %v45 = vld [vmem:[%s1 + $0xdc] sm:$0xf]
  %v46 = vld [vmem:[%s1 + $0xe0] sm:$0xff]
  %v47 = vld [vmem:[%s1 + $0xe8] sm:$0xff]
  %v48 = vld [vmem:[%s1 + $0xf0] sm:$0xff]
  %v49 = vld [vmem:[%s1 + $0xf8] sm:$0xf]
  %v50 = vld [vmem:[%s1 + $0xfc] sm:$0xff]
  %v51 = vld [vmem:[%s1 + $0x104] sm:$0xff]
  %v52 = vld [vmem:[%s1 + $0x10c] sm:$0xff]
  %v53 = vld [vmem:[%s1 + $0x114] sm:$0xf]
  %v54 = vld [vmem:[%s1 + $0x118] sm:$0xff]
  %v55 = vld [vmem:[%s1 + $0x120] sm:$0xff]
  %v56 = vld [vmem:[%s1 + $0x128] sm:$0xff]
  %v57 = vld [vmem:[%s1 + $0x130] sm:$0xf]
  %v58 = vld [vmem:[%s1 + $0x134] sm:$0xff]
  %v59 = vld [vmem:[%s1 + $0x13c] sm:$0xff]
  %v60 = vld [vmem:[%s1 + $0x144] sm:$0xff]
  %v61 = vld [vmem:[%s1 + $0x14c] sm:$0xf]
  %v62 = vld [vmem:[%s1 + $0x150] sm:$0xff]
  %v63 = vld [vmem:[%s1 + $0x158] sm:$0xff]
  %v64 = vld [vmem:[%s1 + $0x160] sm:$0xff]
  %v65 = vld [vmem:[%s1 + $0x168] sm:$0xf]
  %v66 = vld [vmem:[%s1 + $0x16c] sm:$0xff]
  %v67 = vld [vmem:[%s1 + $0x174] sm:$0xff]
  %v68 = vld [vmem:[%s1 + $0x17c] sm:$0xff]
  %v69 = vld [vmem:[%s1 + $0x184] sm:$0xf]
  %v70 = vld [vmem:[%s1 + $0x188] sm:$0xff]
  %v71 = vld [vmem:[%s1 + $0x190] sm:$0xff]
  %v72 = vld [vmem:[%s1 + $0x198] sm:$0xff]
  %v73 = vld [vmem:[%s1 + $0x1a0] sm:$0xf]
  %v74 = vld [vmem:[%s1 + $0x1a4] sm:$0xff]
  %v75 = vld [vmem:[%s1 + $0x1ac] sm:$0xff]
  %v76 = vld [vmem:[%s1 + $0x1b4] sm:$0xff]
  %v77 = vld [vmem:[%s1 + $0x1bc] sm:$0xf]
  %v78 = vld [vmem:[%s1 + $0x1c0] sm:$0xff]
  %v79 = vld [vmem:[%s1 + $0x1c8] sm:$0xff]
  %v80 = vld [vmem:[%s1 + $0x1d0] sm:$0xff]
  %v81 = vld [vmem:[%s1 + $0x1d8] sm:$0xf]
  %v82 = vld [vmem:[%s1 + $0x1dc] sm:$0xff]
  %v83 = vld [vmem:[%s1 + $0x1e4] sm:$0xff]
  %v84 = vld [vmem:[%s1 + $0x1ec] sm:$0xff]
  %v85 = vld [vmem:[%s1 + $0x1f4] sm:$0xf]
  %v86 = vunpack.c.l.bf16 %v14
  %v87 = vunpack.c.h.bf16 %v14
  %v88 = vunpack.c.l.bf16 %v15
  %v89 = vunpack.c.h.bf16 %v15
  %v90 = vunpack.c.l.bf16 %v16
  %v91 = vunpack.c.h.bf16 %v16
  %v92 = vunpack.c.l.bf16 %v17
  %v93 = vunpack.c.l.bf16 %v18
  %v94 = vunpack.c.h.bf16 %v18
  %v95 = vunpack.c.l.bf16 %v19
  %v96 = vunpack.c.h.bf16 %v19
  %v97 = vunpack.c.l.bf16 %v20
  %v98 = vunpack.c.h.bf16 %v20
  %v99 = vunpack.c.l.bf16 %v21
  %v100 = vunpack.c.l.bf16 %v22
  %v101 = vunpack.c.h.bf16 %v22
  %v102 = vunpack.c.l.bf16 %v23
  %v103 = vunpack.c.h.bf16 %v23
  %v104 = vunpack.c.l.bf16 %v24
  %v105 = vunpack.c.h.bf16 %v24
  %v106 = vunpack.c.l.bf16 %v25
  %v107 = vunpack.c.l.bf16 %v26
  %v108 = vunpack.c.h.bf16 %v26
  %v109 = vunpack.c.l.bf16 %v27
  %v110 = vunpack.c.h.bf16 %v27
  %v111 = vunpack.c.l.bf16 %v28
  %v112 = vunpack.c.h.bf16 %v28
  %v113 = vunpack.c.l.bf16 %v29
  %v114 = vunpack.c.l.bf16 %v30
  %v115 = vunpack.c.h.bf16 %v30
  %v116 = vunpack.c.l.bf16 %v31
  %v117 = vunpack.c.h.bf16 %v31
  %v118 = vunpack.c.l.bf16 %v32
  %v119 = vunpack.c.h.bf16 %v32
  %v120 = vunpack.c.l.bf16 %v33
  %v121 = vunpack.c.l.bf16 %v34
  %v122 = vunpack.c.h.bf16 %v34
  %v123 = vunpack.c.l.bf16 %v35
  %v124 = vunpack.c.h.bf16 %v35
  %v125 = vunpack.c.l.bf16 %v36
  %v126 = vunpack.c.h.bf16 %v36
  %v127 = vunpack.c.l.bf16 %v37
  %v128 = vunpack.c.l.bf16 %v38
  %v129 = vunpack.c.h.bf16 %v38
  %v130 = vunpack.c.l.bf16 %v39
  %v131 = vunpack.c.h.bf16 %v39
  %v132 = vunpack.c.l.bf16 %v40
  %v133 = vunpack.c.h.bf16 %v40
  %v134 = vunpack.c.l.bf16 %v41
  %v135 = vunpack.c.l.bf16 %v42
  %v136 = vunpack.c.h.bf16 %v42
  %v137 = vunpack.c.l.bf16 %v43
  %v138 = vunpack.c.h.bf16 %v43
  %v139 = vunpack.c.l.bf16 %v44
  %v140 = vunpack.c.h.bf16 %v44
  %v141 = vunpack.c.l.bf16 %v45
  %v142 = vunpack.c.l.bf16 %v46
  %v143 = vunpack.c.h.bf16 %v46
  %v144 = vunpack.c.l.bf16 %v47
  %v145 = vunpack.c.h.bf16 %v47
  %v146 = vunpack.c.l.bf16 %v48
  %v147 = vunpack.c.h.bf16 %v48
  %v148 = vunpack.c.l.bf16 %v49
  %v149 = vunpack.c.l.bf16 %v50
  %v150 = vunpack.c.h.bf16 %v50
  %v151 = vunpack.c.l.bf16 %v51
  %v152 = vunpack.c.h.bf16 %v51
  %v153 = vunpack.c.l.bf16 %v52
  %v154 = vunpack.c.h.bf16 %v52
  %v155 = vunpack.c.l.bf16 %v53
  %v156 = vunpack.c.l.bf16 %v54
  %v157 = vunpack.c.h.bf16 %v54
  %v158 = vunpack.c.l.bf16 %v55
  %v159 = vunpack.c.h.bf16 %v55
  %v160 = vunpack.c.l.bf16 %v56
  %v161 = vunpack.c.h.bf16 %v56
  %v162 = vunpack.c.l.bf16 %v57
  %v163 = vunpack.c.l.bf16 %v58
  %v164 = vunpack.c.h.bf16 %v58
  %v165 = vunpack.c.l.bf16 %v59
  %v166 = vunpack.c.h.bf16 %v59
  %v167 = vunpack.c.l.bf16 %v60
  %v168 = vunpack.c.h.bf16 %v60
  %v169 = vunpack.c.l.bf16 %v61
  %v170 = vunpack.c.l.bf16 %v62
  %v171 = vunpack.c.h.bf16 %v62
  %v172 = vunpack.c.l.bf16 %v63
  %v173 = vunpack.c.h.bf16 %v63
  %v174 = vunpack.c.l.bf16 %v64
  %v175 = vunpack.c.h.bf16 %v64
  %v176 = vunpack.c.l.bf16 %v65
  %v177 = vunpack.c.l.bf16 %v66
  %v178 = vunpack.c.h.bf16 %v66
  %v179 = vunpack.c.l.bf16 %v67
  %v180 = vunpack.c.h.bf16 %v67
  %v181 = vunpack.c.l.bf16 %v68
  %v182 = vunpack.c.h.bf16 %v68
  %v183 = vunpack.c.l.bf16 %v69
  %v184 = vunpack.c.l.bf16 %v70
  %v185 = vunpack.c.h.bf16 %v70
  %v186 = vunpack.c.l.bf16 %v71
  %v187 = vunpack.c.h.bf16 %v71
  %v188 = vunpack.c.l.bf16 %v72
  %v189 = vunpack.c.h.bf16 %v72
  %v190 = vunpack.c.l.bf16 %v73
  %v191 = vunpack.c.l.bf16 %v74
  %v192 = vunpack.c.h.bf16 %v74
  %v193 = vunpack.c.l.bf16 %v75
  %v194 = vunpack.c.h.bf16 %v75
  %v195 = vunpack.c.l.bf16 %v76
  %v196 = vunpack.c.h.bf16 %v76
  %v197 = vunpack.c.l.bf16 %v77
  %v198 = vunpack.c.l.bf16 %v78
  %v199 = vunpack.c.h.bf16 %v78
  %v200 = vunpack.c.l.bf16 %v79
  %v201 = vunpack.c.h.bf16 %v79
  %v202 = vunpack.c.l.bf16 %v80
  %v203 = vunpack.c.h.bf16 %v80
  %v204 = vunpack.c.l.bf16 %v81
  %v205 = vunpack.c.l.bf16 %v82
  %v206 = vunpack.c.h.bf16 %v82
  %v207 = vunpack.c.l.bf16 %v83
  %v208 = vunpack.c.h.bf16 %v83
  %v209 = vunpack.c.l.bf16 %v84
  %v210 = vunpack.c.h.bf16 %v84
  %v211 = vunpack.c.l.bf16 %v85
  %v212 = vld [vmem:[%s0] sm:$0x7f]
  %v214 = vlaneseq
  %v215 = vshrl.u32 %v214, 7
  %v216 = vsub.s32 0, %v215
  %v217 = vrot.slane %v212, %v216
  %v218 = vlaneseq
  %v219 = vshrl.u32 %v218, 7
  %v220 = vsub.s32 1, %v219
  %v221 = vrot.slane %v212, %v220
  %v222 = vlaneseq
  %v223 = vshrl.u32 %v222, 7
  %v224 = vsub.s32 2, %v223
  %v225 = vrot.slane %v212, %v224
  %v226 = vlaneseq
  %v227 = vshrl.u32 %v226, 7
  %v228 = vsub.s32 3, %v227
  %v229 = vrot.slane %v212, %v228
  %v230 = vlaneseq
  %v231 = vshrl.u32 %v230, 7
  %v232 = vsub.s32 4, %v231
  %v233 = vrot.slane %v212, %v232
  %v234 = vlaneseq
  %v235 = vshrl.u32 %v234, 7
  %v236 = vsub.s32 5, %v235
  %v237 = vrot.slane %v212, %v236
  %v238 = vlaneseq
  %v239 = vshrl.u32 %v238, 7
  %v240 = vsub.s32 6, %v239
  %v241 = vrot.slane %v212, %v240
  %v249 = vmul.f32 %v86, %v217
  %v250 = vmul.f32 %v87, %v221
  %v251 = vmul.f32 %v88, %v225
  %v252 = vmul.f32 %v89, %v229
  %v253 = vmul.f32 %v90, %v233
  %v254 = vmul.f32 %v91, %v237
  %v255 = vmul.f32 %v92, %v241
  %v256 = vmul.f32 %v93, %v217
  %v257 = vmul.f32 %v94, %v221
  %v258 = vmul.f32 %v95, %v225
  %v259 = vmul.f32 %v96, %v229
  %v260 = vmul.f32 %v97, %v233
  %v261 = vmul.f32 %v98, %v237
  %v262 = vmul.f32 %v99, %v241
  %v263 = vmul.f32 %v100, %v217
  %v264 = vmul.f32 %v101, %v221
  %v265 = vmul.f32 %v102, %v225
  %v266 = vmul.f32 %v103, %v229
  %v267 = vmul.f32 %v104, %v233
  %v268 = vmul.f32 %v105, %v237
  %v269 = vmul.f32 %v106, %v241
  %v270 = vmul.f32 %v107, %v217
  %v271 = vmul.f32 %v108, %v221
  %v272 = vmul.f32 %v109, %v225
  %v273 = vmul.f32 %v110, %v229
  %v274 = vmul.f32 %v111, %v233
  %v275 = vmul.f32 %v112, %v237
  %v276 = vmul.f32 %v113, %v241
  %v277 = vmul.f32 %v114, %v217
  %v278 = vmul.f32 %v115, %v221
  %v279 = vmul.f32 %v116, %v225
  %v280 = vmul.f32 %v117, %v229
  %v281 = vmul.f32 %v118, %v233
  %v282 = vmul.f32 %v119, %v237
  %v283 = vmul.f32 %v120, %v241
  %v284 = vmul.f32 %v121, %v217
  %v285 = vmul.f32 %v122, %v221
  %v286 = vmul.f32 %v123, %v225
  %v287 = vmul.f32 %v124, %v229
  %v288 = vmul.f32 %v125, %v233
  %v289 = vmul.f32 %v126, %v237
  %v290 = vmul.f32 %v127, %v241
  %v291 = vmul.f32 %v128, %v217
  %v292 = vmul.f32 %v129, %v221
  %v293 = vmul.f32 %v130, %v225
  %v294 = vmul.f32 %v131, %v229
  %v295 = vmul.f32 %v132, %v233
  %v296 = vmul.f32 %v133, %v237
  %v297 = vmul.f32 %v134, %v241
  %v298 = vmul.f32 %v135, %v217
  %v299 = vmul.f32 %v136, %v221
  %v300 = vmul.f32 %v137, %v225
  %v301 = vmul.f32 %v138, %v229
  %v302 = vmul.f32 %v139, %v233
  %v303 = vmul.f32 %v140, %v237
  %v304 = vmul.f32 %v141, %v241
  %v305 = vmul.f32 %v142, %v217
  %v306 = vmul.f32 %v143, %v221
  %v307 = vmul.f32 %v144, %v225
  %v308 = vmul.f32 %v145, %v229
  %v309 = vmul.f32 %v146, %v233
  %v310 = vmul.f32 %v147, %v237
  %v311 = vmul.f32 %v148, %v241
  %v312 = vmul.f32 %v149, %v217
  %v313 = vmul.f32 %v150, %v221
  %v314 = vmul.f32 %v151, %v225
  %v315 = vmul.f32 %v152, %v229
  %v316 = vmul.f32 %v153, %v233
  %v317 = vmul.f32 %v154, %v237
  %v318 = vmul.f32 %v155, %v241
  %v319 = vmul.f32 %v156, %v217
  %v320 = vmul.f32 %v157, %v221
  %v321 = vmul.f32 %v158, %v225
  %v322 = vmul.f32 %v159, %v229
  %v323 = vmul.f32 %v160, %v233
  %v324 = vmul.f32 %v161, %v237
  %v325 = vmul.f32 %v162, %v241
  %v326 = vmul.f32 %v163, %v217
  %v327 = vmul.f32 %v164, %v221
  %v328 = vmul.f32 %v165, %v225
  %v329 = vmul.f32 %v166, %v229
  %v330 = vmul.f32 %v167, %v233
  %v331 = vmul.f32 %v168, %v237
  %v332 = vmul.f32 %v169, %v241
  %v333 = vmul.f32 %v170, %v217
  %v334 = vmul.f32 %v171, %v221
  %v335 = vmul.f32 %v172, %v225
  %v336 = vmul.f32 %v173, %v229
  %v337 = vmul.f32 %v174, %v233
  %v338 = vmul.f32 %v175, %v237
  %v339 = vmul.f32 %v176, %v241
  %v340 = vmul.f32 %v177, %v217
  %v341 = vmul.f32 %v178, %v221
  %v342 = vmul.f32 %v179, %v225
  %v343 = vmul.f32 %v180, %v229
  %v344 = vmul.f32 %v181, %v233
  %v345 = vmul.f32 %v182, %v237
  %v346 = vmul.f32 %v183, %v241
  %v347 = vmul.f32 %v184, %v217
  %v348 = vmul.f32 %v185, %v221
  %v349 = vmul.f32 %v186, %v225
  %v350 = vmul.f32 %v187, %v229
  %v351 = vmul.f32 %v188, %v233
  %v352 = vmul.f32 %v189, %v237
  %v353 = vmul.f32 %v190, %v241
  %v354 = vmul.f32 %v191, %v217
  %v355 = vmul.f32 %v192, %v221
  %v356 = vmul.f32 %v193, %v225
  %v357 = vmul.f32 %v194, %v229
  %v358 = vmul.f32 %v195, %v233
  %v359 = vmul.f32 %v196, %v237
  %v360 = vmul.f32 %v197, %v241
  %v361 = vmul.f32 %v198, %v217
  %v362 = vmul.f32 %v199, %v221
  %v363 = vmul.f32 %v200, %v225
  %v364 = vmul.f32 %v201, %v229
  %v365 = vmul.f32 %v202, %v233
  %v366 = vmul.f32 %v203, %v237
  %v367 = vmul.f32 %v204, %v241
  %v368 = vmul.f32 %v205, %v217
  %v369 = vmul.f32 %v206, %v221
  %v370 = vmul.f32 %v207, %v225
  %v371 = vmul.f32 %v208, %v229
  %v372 = vmul.f32 %v209, %v233
  %v373 = vmul.f32 %v210, %v237
  %v374 = vmul.f32 %v211, %v241
  %v375 = vld [vmem:[%s2] sm:$0xff]
  %v376 = vld [vmem:[%s2 + $0x8] sm:$0xff]
  %v377 = vld [vmem:[%s2 + $0x10] sm:$0xff]
  %v378 = vld [vmem:[%s2 + $0x18] sm:$0xff]
  %v379 = vld [vmem:[%s2 + $0x20] sm:$0xff]
  %v380 = vld [vmem:[%s2 + $0x28] sm:$0xff]
  %v381 = vld [vmem:[%s2 + $0x30] sm:$0xff]
  %v382 = vld [vmem:[%s2 + $0x38] sm:$0xff]
  %v383 = vld [vmem:[%s2 + $0x40] sm:$0xff]
  %v384 = vld [vmem:[%s2 + $0x48] sm:$0xff]
  %v385 = vld [vmem:[%s2 + $0x50] sm:$0xff]
  %v386 = vld [vmem:[%s2 + $0x58] sm:$0xff]
  %v387 = vld [vmem:[%s2 + $0x60] sm:$0xff]
  %v388 = vld [vmem:[%s2 + $0x68] sm:$0xff]
  %v389 = vld [vmem:[%s2 + $0x70] sm:$0xff]
  %v390 = vld [vmem:[%s2 + $0x78] sm:$0xff]
  %v391 = vld [vmem:[%s2 + $0x80] sm:$0xff]
  %v392 = vld [vmem:[%s2 + $0x88] sm:$0xff]
  %v393 = vld [vmem:[%s2 + $0x90] sm:$0xff]
  %v394 = vld [vmem:[%s2 + $0x98] sm:$0xff]
  %v395 = vld [vmem:[%s2 + $0xa0] sm:$0xff]
  %v396 = vld [vmem:[%s2 + $0xa8] sm:$0xff]
  %v397 = vld [vmem:[%s2 + $0xb0] sm:$0xff]
  %v398 = vld [vmem:[%s2 + $0xb8] sm:$0xff]
  %v399 = vld [vmem:[%s2 + $0xc0] sm:$0xff]
  %v400 = vld [vmem:[%s2 + $0xc8] sm:$0xff]
  %v401 = vld [vmem:[%s2 + $0xd0] sm:$0xff]
  %v402 = vld [vmem:[%s2 + $0xd8] sm:$0xff]
  %v403 = vld [vmem:[%s2 + $0xe0] sm:$0xff]
  %v404 = vld [vmem:[%s2 + $0xe8] sm:$0xff]
  %v405 = vld [vmem:[%s2 + $0xf0] sm:$0xff]
  %v406 = vld [vmem:[%s2 + $0xf8] sm:$0xff]
  %v407 = vld [vmem:[%s2 + $0x100] sm:$0xff]
  %v408 = vld [vmem:[%s2 + $0x108] sm:$0xff]
  %v409 = vld [vmem:[%s2 + $0x110] sm:$0xff]
  %v410 = vld [vmem:[%s2 + $0x118] sm:$0xff]
  %v411 = vld [vmem:[%s2 + $0x120] sm:$0xff]
  %v412 = vld [vmem:[%s2 + $0x128] sm:$0xff]
  %v413 = vld [vmem:[%s2 + $0x130] sm:$0xff]
  %v414 = vld [vmem:[%s2 + $0x138] sm:$0xff]
  %v415 = vld [vmem:[%s2 + $0x140] sm:$0xff]
  %v416 = vld [vmem:[%s2 + $0x148] sm:$0xff]
  %v417 = vld [vmem:[%s2 + $0x150] sm:$0xff]
  %v418 = vld [vmem:[%s2 + $0x158] sm:$0xff]
  %v419 = vld [vmem:[%s2 + $0x160] sm:$0xff]
  %v420 = vld [vmem:[%s2 + $0x168] sm:$0xff]
  %v421 = vld [vmem:[%s2 + $0x170] sm:$0xff]
  %v422 = vld [vmem:[%s2 + $0x178] sm:$0xff]
  %v423 = vld [vmem:[%s2 + $0x180] sm:$0xff]
  %v424 = vld [vmem:[%s2 + $0x188] sm:$0xff]
  %v425 = vld [vmem:[%s2 + $0x190] sm:$0xff]
  %v426 = vld [vmem:[%s2 + $0x198] sm:$0xff]
  %v427 = vld [vmem:[%s2 + $0x1a0] sm:$0xff]
  %v428 = vld [vmem:[%s2 + $0x1a8] sm:$0xff]
  %v429 = vld [vmem:[%s2 + $0x1b0] sm:$0xff]
  %v430 = vld [vmem:[%s2 + $0x1b8] sm:$0xff]
  %v431 = vld [vmem:[%s2 + $0x1c0] sm:$0xff]
  %v432 = vld [vmem:[%s2 + $0x1c8] sm:$0xff]
  %v433 = vld [vmem:[%s2 + $0x1d0] sm:$0xff]
  %v434 = vld [vmem:[%s2 + $0x1d8] sm:$0xff]
  %v435 = vld [vmem:[%s2 + $0x1e0] sm:$0xff]
  %v436 = vld [vmem:[%s2 + $0x1e8] sm:$0xff]
  %v437 = vld [vmem:[%s2 + $0x1f0] sm:$0xff]
  %v438 = vld [vmem:[%s2 + $0x1f8] sm:$0xff]
  %v439 = vld [vmem:[%s2 + $0x200] sm:$0xff]
  %v440 = vld [vmem:[%s2 + $0x208] sm:$0xff]
  %v441 = vld [vmem:[%s2 + $0x210] sm:$0xff]
  %v442 = vld [vmem:[%s2 + $0x218] sm:$0xff]
  %v443 = vld [vmem:[%s2 + $0x220] sm:$0xff]
  %v444 = vld [vmem:[%s2 + $0x228] sm:$0xff]
  %v445 = vld [vmem:[%s2 + $0x230] sm:$0xff]
  %v446 = vld [vmem:[%s2 + $0x238] sm:$0xff]
  %v447 = vld [vmem:[%s2 + $0x240] sm:$0xff]
  %v448 = vld [vmem:[%s2 + $0x248] sm:$0xff]
  %v449 = vld [vmem:[%s2 + $0x250] sm:$0xff]
  %v450 = vld [vmem:[%s2 + $0x258] sm:$0xff]
  %v451 = vld [vmem:[%s2 + $0x260] sm:$0xff]
  %v452 = vld [vmem:[%s2 + $0x268] sm:$0xff]
  %v453 = vld [vmem:[%s2 + $0x270] sm:$0xff]
  %v454 = vld [vmem:[%s2 + $0x278] sm:$0xff]
  %v455 = vld [vmem:[%s2 + $0x280] sm:$0xff]
  %v456 = vld [vmem:[%s2 + $0x288] sm:$0xff]
  %v457 = vld [vmem:[%s2 + $0x290] sm:$0xff]
  %v458 = vld [vmem:[%s2 + $0x298] sm:$0xff]
  %v459 = vld [vmem:[%s2 + $0x2a0] sm:$0xff]
  %v460 = vld [vmem:[%s2 + $0x2a8] sm:$0xff]
  %v461 = vld [vmem:[%s2 + $0x2b0] sm:$0xff]
  %v462 = vld [vmem:[%s2 + $0x2b8] sm:$0xff]
  %v463 = vld [vmem:[%s2 + $0x2c0] sm:$0xff]
  %v464 = vld [vmem:[%s2 + $0x2c8] sm:$0xff]
  %v465 = vld [vmem:[%s2 + $0x2d0] sm:$0xff]
  %v466 = vld [vmem:[%s2 + $0x2d8] sm:$0xff]
  %v467 = vld [vmem:[%s2 + $0x2e0] sm:$0xff]
  %v468 = vld [vmem:[%s2 + $0x2e8] sm:$0xff]
  %v469 = vld [vmem:[%s2 + $0x2f0] sm:$0xff]
  %v470 = vld [vmem:[%s2 + $0x2f8] sm:$0xff]
  %v471 = vld [vmem:[%s2 + $0x300] sm:$0xff]
  %v472 = vld [vmem:[%s2 + $0x308] sm:$0xff]
  %v473 = vld [vmem:[%s2 + $0x310] sm:$0xff]
  %v474 = vld [vmem:[%s2 + $0x318] sm:$0xff]
  %v475 = vld [vmem:[%s2 + $0x320] sm:$0xff]
  %v476 = vld [vmem:[%s2 + $0x328] sm:$0xff]
  %v477 = vld [vmem:[%s2 + $0x330] sm:$0xff]
  %v478 = vld [vmem:[%s2 + $0x338] sm:$0xff]
  %v479 = vld [vmem:[%s2 + $0x340] sm:$0xff]
  %v480 = vld [vmem:[%s2 + $0x348] sm:$0xff]
  %v481 = vld [vmem:[%s2 + $0x350] sm:$0xff]
  %v482 = vld [vmem:[%s2 + $0x358] sm:$0xff]
  %v483 = vld [vmem:[%s2 + $0x360] sm:$0xff]
  %v484 = vld [vmem:[%s2 + $0x368] sm:$0xff]
  %v485 = vld [vmem:[%s2 + $0x370] sm:$0xff]
  %v486 = vld [vmem:[%s2 + $0x378] sm:$0xff]
  %v487 = vld [vmem:[%s2 + $0x380] sm:$0xff]
  %v488 = vld [vmem:[%s2 + $0x388] sm:$0xff]
  %v489 = vld [vmem:[%s2 + $0x390] sm:$0xff]
  %v490 = vld [vmem:[%s2 + $0x398] sm:$0xff]
  %v491 = vld [vmem:[%s2 + $0x3a0] sm:$0xff]
  %v492 = vld [vmem:[%s2 + $0x3a8] sm:$0xff]
  %v493 = vld [vmem:[%s2 + $0x3b0] sm:$0xff]
  %v494 = vld [vmem:[%s2 + $0x3b8] sm:$0xff]
  %v495 = vld [vmem:[%s2 + $0x3c0] sm:$0xff]
  %v496 = vld [vmem:[%s2 + $0x3c8] sm:$0xff]
  %v497 = vld [vmem:[%s2 + $0x3d0] sm:$0xff]
  %v498 = vld [vmem:[%s2 + $0x3d8] sm:$0xff]
  %v499 = vld [vmem:[%s2 + $0x3e0] sm:$0xff]
  %v500 = vld [vmem:[%s2 + $0x3e8] sm:$0xff]
  %v501 = vld [vmem:[%s2 + $0x3f0] sm:$0xff]
  %v502 = vld [vmem:[%s2 + $0x3f8] sm:$0xff]
  %v503 = vld [vmem:[%s2 + $0x400] sm:$0xff]
  %v504 = vld [vmem:[%s2 + $0x408] sm:$0xff]
  %v505 = vld [vmem:[%s2 + $0x410] sm:$0xff]
  %v506 = vld [vmem:[%s2 + $0x418] sm:$0xff]
  %v507 = vld [vmem:[%s2 + $0x420] sm:$0xff]
  %v508 = vld [vmem:[%s2 + $0x428] sm:$0xff]
  %v509 = vld [vmem:[%s2 + $0x430] sm:$0xff]
  %v510 = vld [vmem:[%s2 + $0x438] sm:$0xff]
  %v511 = vld [vmem:[%s2 + $0x440] sm:$0xff]
  %v512 = vld [vmem:[%s2 + $0x448] sm:$0xff]
  %v513 = vld [vmem:[%s2 + $0x450] sm:$0xff]
  %v514 = vld [vmem:[%s2 + $0x458] sm:$0xff]
  %v515 = vld [vmem:[%s2 + $0x460] sm:$0xff]
  %v516 = vld [vmem:[%s2 + $0x468] sm:$0xff]
  %v517 = vld [vmem:[%s2 + $0x470] sm:$0xff]
  %v518 = vld [vmem:[%s2 + $0x478] sm:$0xff]
  %v519 = vld [vmem:[%s2 + $0x480] sm:$0xff]
  %v520 = vld [vmem:[%s2 + $0x488] sm:$0xff]
  %v521 = vld [vmem:[%s2 + $0x490] sm:$0xff]
  %v522 = vld [vmem:[%s2 + $0x498] sm:$0xff]
  %v523 = vld [vmem:[%s2 + $0x4a0] sm:$0xff]
  %v524 = vld [vmem:[%s2 + $0x4a8] sm:$0xff]
  %v525 = vld [vmem:[%s2 + $0x4b0] sm:$0xff]
  %v526 = vld [vmem:[%s2 + $0x4b8] sm:$0xff]
  %v527 = vld [vmem:[%s2 + $0x4c0] sm:$0xff]
  %v528 = vld [vmem:[%s2 + $0x4c8] sm:$0xff]
  %v529 = vld [vmem:[%s2 + $0x4d0] sm:$0xff]
  %v530 = vld [vmem:[%s2 + $0x4d8] sm:$0xff]
  %v531 = vld [vmem:[%s2 + $0x4e0] sm:$0xff]
  %v532 = vld [vmem:[%s2 + $0x4e8] sm:$0xff]
  %v533 = vld [vmem:[%s2 + $0x4f0] sm:$0xff]
  %v534 = vld [vmem:[%s2 + $0x4f8] sm:$0xff]
  %v535 = vld [vmem:[%s2 + $0x500] sm:$0xff]
  %v536 = vld [vmem:[%s2 + $0x508] sm:$0xff]
  %v537 = vld [vmem:[%s2 + $0x510] sm:$0xff]
  %v538 = vld [vmem:[%s2 + $0x518] sm:$0xff]
  %v539 = vld [vmem:[%s2 + $0x520] sm:$0xff]
  %v540 = vld [vmem:[%s2 + $0x528] sm:$0xff]
  %v541 = vld [vmem:[%s2 + $0x530] sm:$0xff]
  %v542 = vld [vmem:[%s2 + $0x538] sm:$0xff]
  %v543 = vld [vmem:[%s2 + $0x540] sm:$0xff]
  %v544 = vld [vmem:[%s2 + $0x548] sm:$0xff]
  %v545 = vld [vmem:[%s2 + $0x550] sm:$0xff]
  %v546 = vld [vmem:[%s2 + $0x558] sm:$0xff]
  %v547 = vld [vmem:[%s2 + $0x560] sm:$0xff]
  %v548 = vld [vmem:[%s2 + $0x568] sm:$0xff]
  %v549 = vld [vmem:[%s2 + $0x570] sm:$0xff]
  %v550 = vld [vmem:[%s2 + $0x578] sm:$0xff]
  %v551 = vld [vmem:[%s2 + $0x580] sm:$0xff]
  %v552 = vld [vmem:[%s2 + $0x588] sm:$0xff]
  %v553 = vld [vmem:[%s2 + $0x590] sm:$0xff]
  %v554 = vld [vmem:[%s2 + $0x598] sm:$0xff]
  %v555 = vld [vmem:[%s2 + $0x5a0] sm:$0xff]
  %v556 = vld [vmem:[%s2 + $0x5a8] sm:$0xff]
  %v557 = vld [vmem:[%s2 + $0x5b0] sm:$0xff]
  %v558 = vld [vmem:[%s2 + $0x5b8] sm:$0xff]
  %v559 = vld [vmem:[%s2 + $0x5c0] sm:$0xff]
  %v560 = vld [vmem:[%s2 + $0x5c8] sm:$0xff]
  %v561 = vld [vmem:[%s2 + $0x5d0] sm:$0xff]
  %v562 = vld [vmem:[%s2 + $0x5d8] sm:$0xff]
  %v563 = vld [vmem:[%s2 + $0x5e0] sm:$0xff]
  %v564 = vld [vmem:[%s2 + $0x5e8] sm:$0xff]
  %v565 = vld [vmem:[%s2 + $0x5f0] sm:$0xff]
  %v566 = vld [vmem:[%s2 + $0x5f8] sm:$0xff]
  %v567 = vld [vmem:[%s2 + $0x600] sm:$0xff]
  %v568 = vld [vmem:[%s2 + $0x608] sm:$0xff]
  %v569 = vld [vmem:[%s2 + $0x610] sm:$0xff]
  %v570 = vld [vmem:[%s2 + $0x618] sm:$0xff]
  %v571 = vld [vmem:[%s2 + $0x620] sm:$0xff]
  %v572 = vld [vmem:[%s2 + $0x628] sm:$0xff]
  %v573 = vld [vmem:[%s2 + $0x630] sm:$0xff]
  %v574 = vld [vmem:[%s2 + $0x638] sm:$0xff]
  %v575 = vld [vmem:[%s2 + $0x640] sm:$0xff]
  %v576 = vld [vmem:[%s2 + $0x648] sm:$0xff]
  %v577 = vld [vmem:[%s2 + $0x650] sm:$0xff]
  %v578 = vld [vmem:[%s2 + $0x658] sm:$0xff]
  %v579 = vld [vmem:[%s2 + $0x660] sm:$0xff]
  %v580 = vld [vmem:[%s2 + $0x668] sm:$0xff]
  %v581 = vld [vmem:[%s2 + $0x670] sm:$0xff]
  %v582 = vld [vmem:[%s2 + $0x678] sm:$0xff]
  %v583 = vld [vmem:[%s2 + $0x680] sm:$0xff]
  %v584 = vld [vmem:[%s2 + $0x688] sm:$0xff]
  %v585 = vld [vmem:[%s2 + $0x690] sm:$0xff]
  %v586 = vld [vmem:[%s2 + $0x698] sm:$0xff]
  %v587 = vld [vmem:[%s2 + $0x6a0] sm:$0xff]
  %v588 = vld [vmem:[%s2 + $0x6a8] sm:$0xff]
  %v589 = vld [vmem:[%s2 + $0x6b0] sm:$0xff]
  %v590 = vld [vmem:[%s2 + $0x6b8] sm:$0xff]
  %vm591 = vcmask 785408
  %v593 = vsel %vm591, %v255, 0
  %v596 = vsel %vm591, %v262, 0
  %v599 = vsel %vm591, %v269, 0
  %v602 = vsel %vm591, %v276, 0
  %v605 = vsel %vm591, %v283, 0
  %v608 = vsel %vm591, %v290, 0
  %v611 = vsel %vm591, %v297, 0
  %v614 = vsel %vm591, %v304, 0
  %v617 = vsel %vm591, %v311, 0
  %v620 = vsel %vm591, %v318, 0
  %v623 = vsel %vm591, %v325, 0
  %v626 = vsel %vm591, %v332, 0
  %v629 = vsel %vm591, %v339, 0
  %v632 = vsel %vm591, %v346, 0
  %v635 = vsel %vm591, %v353, 0
  %v638 = vsel %vm591, %v360, 0
  %v641 = vsel %vm591, %v367, 0
  %v644 = vsel %vm591, %v374, 0
  %646 = vmatprep.subr.mxu0 %v376
  %647 = vmatpush1.msra.mxu0 %v375
  %648 = vmatprep.subr.mxu0 %v378
  %649 = vmatpush1.msra.mxu0 %v377
  %650 = vmatprep.subr.mxu0 %v380
  %651 = vmatpush1.msra.mxu0 %v379
  %652 = vmatprep.subr.mxu0 %v382
  %653 = vmatpush1.msra.mxu0 %v381
  %654 = vmatprep.subr.mxu0 %v384
  %655 = vmatpush1.msra.mxu0 %v383
  %656 = vmatprep.subr.mxu0 %v386
  %657 = vmatpush1.msra.mxu0 %v385
  %658 = vmatprep.subr.mxu0 %v388
  %659 = vmatpush1.msra.mxu0 %v387
  %660 = vmatprep.subr.mxu0 %v390
  %661 = vmatpush1.msra.mxu0 %v389
  %662 = vmatprep.subr.mxu0 %v392
  %663 = vmatpush1.msra.mxu0 %v391
  %664 = vmatprep.subr.mxu0 %v394
  %665 = vmatpush1.msra.mxu0 %v393
  %666 = vmatprep.subr.mxu0 %v396
  %667 = vmatpush1.msra.mxu0 %v395
  %668 = vmatprep.subr.mxu0 %v398
  %669 = vmatpush1.msra.mxu0 %v397
  %670 = vmatprep.subr.mxu0 %v400
  %671 = vmatpush1.msra.mxu0 %v399
  %672 = vmatprep.subr.mxu0 %v402
  %673 = vmatpush1.msra.mxu0 %v401
  %674 = vmatprep.subr.mxu0 %v404
  %675 = vmatpush1.msra.mxu0 %v403
  %676 = vmatprep.subr.mxu0 %v406
  %677 = vmatpush1.msra.mxu0 %v405
  %678 = vmatprep.subr.mxu0 %v408
  %679 = vmatpush1.msra.mxu0 %v407
  %680 = vmatprep.subr.mxu0 %v410
  %681 = vmatpush1.msra.mxu0 %v409
  %682 = vmatprep.subr.mxu0 %v412
  %683 = vmatpush1.msra.mxu0 %v411
  %684 = vmatprep.subr.mxu0 %v414
  %685 = vmatpush1.msra.mxu0 %v413
  %686 = vmatprep.subr.mxu0 %v416
  %687 = vmatpush1.msra.mxu0 %v415
  %688 = vmatprep.subr.mxu0 %v418
  %689 = vmatpush1.msra.mxu0 %v417
  %690 = vmatprep.subr.mxu0 %v420
  %691 = vmatpush1.msra.mxu0 %v419
  %692 = vmatprep.subr.mxu0 %v422
  %693 = vmatpush1.msra.mxu0 %v421
  %694 = vmatprep.subr.mxu0 %v424
  %695 = vmatpush1.msra.mxu0 %v423
  %696 = vmatprep.subr.mxu0 %v426
  %697 = vmatpush1.msra.mxu0 %v425
  %698 = vmatprep.subr.mxu0 %v428
  %699 = vmatpush1.msra.mxu0 %v427
  %700 = vmatprep.subr.mxu0 %v430
  %701 = vmatpush1.msra.mxu0 %v429
  %702 = vmatprep.subr.mxu0 %v432
  %703 = vmatpush1.msra.mxu0 %v431
  %704 = vmatprep.subr.mxu0 %v434
  %705 = vmatpush1.msra.mxu0 %v433
  %706 = vmatprep.subr.mxu0 %v436
  %707 = vmatpush1.msra.mxu0 %v435
  %708 = vmatprep.subr.mxu0 %v438
  %709 = vmatpush1.msra.mxu0 %v437
  %710 = vmatprep.mubr.f32.mxu0 %v250
  %711 = vmatmul.mubr.f32.gmra.mrb[0].mxu0 %v249
  %v712 = vpop.f32.mrb[0].mxu0
  %v713 = vadd.f32 0.0, %v712
  %v714 = vpop.f32.mrb[0].mxu0
  %v715 = vadd.f32 0.0, %v714
  %716 = vmatprep.mubr.f32.mxu0 %v257
  %717 = vmatmul.mubr.f32.gmra.mrb[0].mxu0 %v256
  %v718 = vpop.f32.mrb[0].mxu0
  %v719 = vadd.f32 0.0, %v718
  %v720 = vpop.f32.mrb[0].mxu0
  %v721 = vadd.f32 0.0, %v720
  %722 = vmatprep.mubr.f32.mxu0 %v264
  %723 = vmatmul.mubr.f32.gmra.mrb[0].mxu0 %v263
  %v724 = vpop.f32.mrb[0].mxu0
  %v725 = vadd.f32 0.0, %v724
  %v726 = vpop.f32.mrb[0].mxu0
  %v727 = vadd.f32 0.0, %v726
  %728 = vmatprep.mubr.f32.mxu0 %v271
  %729 = vmatmul.mubr.f32.gmra.mrb[0].mxu0 %v270
  %v730 = vpop.f32.mrb[0].mxu0
  %v731 = vadd.f32 0.0, %v730
  %v732 = vpop.f32.mrb[0].mxu0
  %v733 = vadd.f32 0.0, %v732
  %734 = vmatprep.mubr.f32.mxu0 %v278
  %735 = vmatmul.mubr.f32.gmra.mrb[0].mxu0 %v277
  %v736 = vpop.f32.mrb[0].mxu0
  %v737 = vadd.f32 0.0, %v736
  %v738 = vpop.f32.mrb[0].mxu0
  %v739 = vadd.f32 0.0, %v738
  %740 = vmatprep.mubr.f32.mxu0 %v285
  %741 = vmatmul.mubr.f32.gmra.mrb[0].mxu0 %v284
  %v742 = vpop.f32.mrb[0].mxu0
  %v743 = vadd.f32 0.0, %v742
  %v744 = vpop.f32.mrb[0].mxu0
  %v745 = vadd.f32 0.0, %v744
  %746 = vmatprep.mubr.f32.mxu0 %v292
  %747 = vmatmul.mubr.f32.gmra.mrb[0].mxu0 %v291
  %v748 = vpop.f32.mrb[0].mxu0
  %v749 = vadd.f32 0.0, %v748
  %v750 = vpop.f32.mrb[0].mxu0
  %v751 = vadd.f32 0.0, %v750
  %752 = vmatprep.mubr.f32.mxu0 %v299
  %753 = vmatmul.mubr.f32.gmra.mrb[0].mxu0 %v298
  %v754 = vpop.f32.mrb[0].mxu0
  %v755 = vadd.f32 0.0, %v754
  %v756 = vpop.f32.mrb[0].mxu0
  %v757 = vadd.f32 0.0, %v756
  %758 = vmatprep.mubr.f32.mxu0 %v306
  %759 = vmatmul.mubr.f32.gmra.mrb[0].mxu0 %v305
  %v760 = vpop.f32.mrb[0].mxu0
  %v761 = vadd.f32 0.0, %v760
  %v762 = vpop.f32.mrb[0].mxu0
  %v763 = vadd.f32 0.0, %v762
  %764 = vmatprep.mubr.f32.mxu0 %v313
  %765 = vmatmul.mubr.f32.gmra.mrb[0].mxu0 %v312
  %v766 = vpop.f32.mrb[0].mxu0
  %v767 = vadd.f32 0.0, %v766
  %v768 = vpop.f32.mrb[0].mxu0
  %v769 = vadd.f32 0.0, %v768
  %770 = vmatprep.mubr.f32.mxu0 %v320
  %771 = vmatmul.mubr.f32.gmra.mrb[0].mxu0 %v319
  %v772 = vpop.f32.mrb[0].mxu0
  %v773 = vadd.f32 0.0, %v772
  %v774 = vpop.f32.mrb[0].mxu0
  %v775 = vadd.f32 0.0, %v774
  %776 = vmatprep.mubr.f32.mxu0 %v327
  %777 = vmatmul.mubr.f32.gmra.mrb[0].mxu0 %v326
  %v778 = vpop.f32.mrb[0].mxu0
  %v779 = vadd.f32 0.0, %v778
  %v780 = vpop.f32.mrb[0].mxu0
  %v781 = vadd.f32 0.0, %v780
  %782 = vmatprep.mubr.f32.mxu0 %v334
  %783 = vmatmul.mubr.f32.gmra.mrb[0].mxu0 %v333
  %v784 = vpop.f32.mrb[0].mxu0
  %v785 = vadd.f32 0.0, %v784
  %v786 = vpop.f32.mrb[0].mxu0
  %v787 = vadd.f32 0.0, %v786
  %788 = vmatprep.mubr.f32.mxu0 %v341
  %789 = vmatmul.mubr.f32.gmra.mrb[0].mxu0 %v340
  %v790 = vpop.f32.mrb[0].mxu0
  %v791 = vadd.f32 0.0, %v790
  %v792 = vpop.f32.mrb[0].mxu0
  %v793 = vadd.f32 0.0, %v792
  %794 = vmatprep.mubr.f32.mxu0 %v348
  %795 = vmatmul.mubr.f32.gmra.mrb[0].mxu0 %v347
  %v796 = vpop.f32.mrb[0].mxu0
  %v797 = vadd.f32 0.0, %v796
  %v798 = vpop.f32.mrb[0].mxu0
  %v799 = vadd.f32 0.0, %v798
  %800 = vmatprep.mubr.f32.mxu0 %v355
  %801 = vmatmul.mubr.f32.gmra.mrb[0].mxu0 %v354
  %v802 = vpop.f32.mrb[0].mxu0
  %v803 = vadd.f32 0.0, %v802
  %v804 = vpop.f32.mrb[0].mxu0
  %v805 = vadd.f32 0.0, %v804
  %806 = vmatprep.mubr.f32.mxu0 %v362
  %807 = vmatmul.mubr.f32.gmra.mrb[0].mxu0 %v361
  %v808 = vpop.f32.mrb[0].mxu0
  %v809 = vadd.f32 0.0, %v808
  %v810 = vpop.f32.mrb[0].mxu0
  %v811 = vadd.f32 0.0, %v810
  %812 = vmatprep.mubr.f32.mxu0 %v369
  %813 = vmatmul.mubr.f32.gmra.mrb[0].mxu0 %v368
  %v814 = vpop.f32.mrb[0].mxu0
  %v815 = vadd.f32 0.0, %v814
  %v816 = vpop.f32.mrb[0].mxu0
  %v817 = vadd.f32 0.0, %v816
  %818 = vdwg.mxu0
  %819 = vmatprep.subr.mxu0 %v440
  %820 = vmatpush1.msra.mxu0 %v439
  %821 = vmatprep.subr.mxu0 %v442
  %822 = vmatpush1.msra.mxu0 %v441
  %823 = vmatprep.subr.mxu0 %v444
  %824 = vmatpush1.msra.mxu0 %v443
  %825 = vmatprep.subr.mxu0 %v446
  %826 = vmatpush1.msra.mxu0 %v445
  %827 = vmatprep.subr.mxu0 %v448
  %828 = vmatpush1.msra.mxu0 %v447
  %829 = vmatprep.subr.mxu0 %v450
  %830 = vmatpush1.msra.mxu0 %v449
  %831 = vmatprep.subr.mxu0 %v452
  %832 = vmatpush1.msra.mxu0 %v451
  %833 = vmatprep.subr.mxu0 %v454
  %834 = vmatpush1.msra.mxu0 %v453
  %835 = vmatprep.subr.mxu0 %v456
  %836 = vmatpush1.msra.mxu0 %v455
  %837 = vmatprep.subr.mxu0 %v458
  %838 = vmatpush1.msra.mxu0 %v457
  %839 = vmatprep.subr.mxu0 %v460
  %840 = vmatpush1.msra.mxu0 %v459
  %841 = vmatprep.subr.mxu0 %v462
  %842 = vmatpush1.msra.mxu0 %v461
  %843 = vmatprep.subr.mxu0 %v464
  %844 = vmatpush1.msra.mxu0 %v463
  %845 = vmatprep.subr.mxu0 %v466
  %846 = vmatpush1.msra.mxu0 %v465
  %847 = vmatprep.subr.mxu0 %v468
  %848 = vmatpush1.msra.mxu0 %v467
  %849 = vmatprep.subr.mxu0 %v470
  %850 = vmatpush1.msra.mxu0 %v469
  %851 = vmatprep.subr.mxu0 %v472
  %852 = vmatpush1.msra.mxu0 %v471
  %853 = vmatprep.subr.mxu0 %v474
  %854 = vmatpush1.msra.mxu0 %v473
  %855 = vmatprep.subr.mxu0 %v476
  %856 = vmatpush1.msra.mxu0 %v475
  %857 = vmatprep.subr.mxu0 %v478
  %858 = vmatpush1.msra.mxu0 %v477
  %859 = vmatprep.subr.mxu0 %v480
  %860 = vmatpush1.msra.mxu0 %v479
  %861 = vmatprep.subr.mxu0 %v482
  %862 = vmatpush1.msra.mxu0 %v481
  %863 = vmatprep.subr.mxu0 %v484
  %864 = vmatpush1.msra.mxu0 %v483
  %865 = vmatprep.subr.mxu0 %v486
  %866 = vmatpush1.msra.mxu0 %v485
  %867 = vmatprep.subr.mxu0 %v488
  %868 = vmatpush1.msra.mxu0 %v487
  %869 = vmatprep.subr.mxu0 %v490
  %870 = vmatpush1.msra.mxu0 %v489
  %871 = vmatprep.subr.mxu0 %v492
  %872 = vmatpush1.msra.mxu0 %v491
  %873 = vmatprep.subr.mxu0 %v494
  %874 = vmatpush1.msra.mxu0 %v493
  %875 = vmatprep.subr.mxu0 %v496
  %876 = vmatpush1.msra.mxu0 %v495
  %877 = vmatprep.subr.mxu0 %v498
  %878 = vmatpush1.msra.mxu0 %v497
  %879 = vmatprep.subr.mxu0 %v500
  %880 = vmatpush1.msra.mxu0 %v499
  %881 = vmatprep.subr.mxu0 %v502
  %882 = vmatpush1.msra.mxu0 %v501
  %883 = vmatprep.mubr.f32.mxu0 %v252
  %884 = vmatmul.mubr.f32.gmra.mrb[0].mxu0 %v251
  %v885 = vpop.f32.mrb[0].mxu0
  %v886 = vadd.f32 %v713, %v885
  %v887 = vpop.f32.mrb[0].mxu0
  %v888 = vadd.f32 %v715, %v887
  %889 = vmatprep.mubr.f32.mxu0 %v259
  %890 = vmatmul.mubr.f32.gmra.mrb[0].mxu0 %v258
  %v891 = vpop.f32.mrb[0].mxu0
  %v892 = vadd.f32 %v719, %v891
  %v893 = vpop.f32.mrb[0].mxu0
  %v894 = vadd.f32 %v721, %v893
  %895 = vmatprep.mubr.f32.mxu0 %v266
  %896 = vmatmul.mubr.f32.gmra.mrb[0].mxu0 %v265
  %v897 = vpop.f32.mrb[0].mxu0
  %v898 = vadd.f32 %v725, %v897
  %v899 = vpop.f32.mrb[0].mxu0
  %v900 = vadd.f32 %v727, %v899
  %901 = vmatprep.mubr.f32.mxu0 %v273
  %902 = vmatmul.mubr.f32.gmra.mrb[0].mxu0 %v272
  %v903 = vpop.f32.mrb[0].mxu0
  %v904 = vadd.f32 %v731, %v903
  %v905 = vpop.f32.mrb[0].mxu0
  %v906 = vadd.f32 %v733, %v905
  %907 = vmatprep.mubr.f32.mxu0 %v280
  %908 = vmatmul.mubr.f32.gmra.mrb[0].mxu0 %v279
  %v909 = vpop.f32.mrb[0].mxu0
  %v910 = vadd.f32 %v737, %v909
  %v911 = vpop.f32.mrb[0].mxu0
  %v912 = vadd.f32 %v739, %v911
  %913 = vmatprep.mubr.f32.mxu0 %v287
  %914 = vmatmul.mubr.f32.gmra.mrb[0].mxu0 %v286
  %v915 = vpop.f32.mrb[0].mxu0
  %v916 = vadd.f32 %v743, %v915
  %v917 = vpop.f32.mrb[0].mxu0
  %v918 = vadd.f32 %v745, %v917
  %919 = vmatprep.mubr.f32.mxu0 %v294
  %920 = vmatmul.mubr.f32.gmra.mrb[0].mxu0 %v293
  %v921 = vpop.f32.mrb[0].mxu0
  %v922 = vadd.f32 %v749, %v921
  %v923 = vpop.f32.mrb[0].mxu0
  %v924 = vadd.f32 %v751, %v923
  %925 = vmatprep.mubr.f32.mxu0 %v301
  %926 = vmatmul.mubr.f32.gmra.mrb[0].mxu0 %v300
  %v927 = vpop.f32.mrb[0].mxu0
  %v928 = vadd.f32 %v755, %v927
  %v929 = vpop.f32.mrb[0].mxu0
  %v930 = vadd.f32 %v757, %v929
  %931 = vmatprep.mubr.f32.mxu0 %v308
  %932 = vmatmul.mubr.f32.gmra.mrb[0].mxu0 %v307
  %v933 = vpop.f32.mrb[0].mxu0
  %v934 = vadd.f32 %v761, %v933
  %v935 = vpop.f32.mrb[0].mxu0
  %v936 = vadd.f32 %v763, %v935
  %937 = vmatprep.mubr.f32.mxu0 %v315
  %938 = vmatmul.mubr.f32.gmra.mrb[0].mxu0 %v314
  %v939 = vpop.f32.mrb[0].mxu0
  %v940 = vadd.f32 %v767, %v939
  %v941 = vpop.f32.mrb[0].mxu0
  %v942 = vadd.f32 %v769, %v941
  %943 = vmatprep.mubr.f32.mxu0 %v322
  %944 = vmatmul.mubr.f32.gmra.mrb[0].mxu0 %v321
  %v945 = vpop.f32.mrb[0].mxu0
  %v946 = vadd.f32 %v773, %v945
  %v947 = vpop.f32.mrb[0].mxu0
  %v948 = vadd.f32 %v775, %v947
  %949 = vmatprep.mubr.f32.mxu0 %v329
  %950 = vmatmul.mubr.f32.gmra.mrb[0].mxu0 %v328
  %v951 = vpop.f32.mrb[0].mxu0
  %v952 = vadd.f32 %v779, %v951
  %v953 = vpop.f32.mrb[0].mxu0
  %v954 = vadd.f32 %v781, %v953
  %955 = vmatprep.mubr.f32.mxu0 %v336
  %956 = vmatmul.mubr.f32.gmra.mrb[0].mxu0 %v335
  %v957 = vpop.f32.mrb[0].mxu0
  %v958 = vadd.f32 %v785, %v957
  %v959 = vpop.f32.mrb[0].mxu0
  %v960 = vadd.f32 %v787, %v959
  %961 = vmatprep.mubr.f32.mxu0 %v343
  %962 = vmatmul.mubr.f32.gmra.mrb[0].mxu0 %v342
  %v963 = vpop.f32.mrb[0].mxu0
  %v964 = vadd.f32 %v791, %v963
  %v965 = vpop.f32.mrb[0].mxu0
  %v966 = vadd.f32 %v793, %v965
  %967 = vmatprep.mubr.f32.mxu0 %v350
  %968 = vmatmul.mubr.f32.gmra.mrb[0].mxu0 %v349
  %v969 = vpop.f32.mrb[0].mxu0
  %v970 = vadd.f32 %v797, %v969
  %v971 = vpop.f32.mrb[0].mxu0
  %v972 = vadd.f32 %v799, %v971
  %973 = vmatprep.mubr.f32.mxu0 %v357
  %974 = vmatmul.mubr.f32.gmra.mrb[0].mxu0 %v356
  %v975 = vpop.f32.mrb[0].mxu0
  %v976 = vadd.f32 %v803, %v975
  %v977 = vpop.f32.mrb[0].mxu0
  %v978 = vadd.f32 %v805, %v977
  %979 = vmatprep.mubr.f32.mxu0 %v364
  %980 = vmatmul.mubr.f32.gmra.mrb[0].mxu0 %v363
  %v981 = vpop.f32.mrb[0].mxu0
  %v982 = vadd.f32 %v809, %v981
  %v983 = vpop.f32.mrb[0].mxu0
  %v984 = vadd.f32 %v811, %v983
  %985 = vmatprep.mubr.f32.mxu0 %v371
  %986 = vmatmul.mubr.f32.gmra.mrb[0].mxu0 %v370
  %v987 = vpop.f32.mrb[0].mxu0
  %v988 = vadd.f32 %v815, %v987
  %v989 = vpop.f32.mrb[0].mxu0
  %v990 = vadd.f32 %v817, %v989
  %991 = vdwg.mxu0
  %992 = vmatprep.subr.mxu0 %v504
  %993 = vmatpush1.msra.mxu0 %v503
  %994 = vmatprep.subr.mxu0 %v506
  %995 = vmatpush1.msra.mxu0 %v505
  %996 = vmatprep.subr.mxu0 %v508
  %997 = vmatpush1.msra.mxu0 %v507
  %998 = vmatprep.subr.mxu0 %v510
  %999 = vmatpush1.msra.mxu0 %v509
  %1000 = vmatprep.subr.mxu0 %v512
  %1001 = vmatpush1.msra.mxu0 %v511
  %1002 = vmatprep.subr.mxu0 %v514
  %1003 = vmatpush1.msra.mxu0 %v513
  %1004 = vmatprep.subr.mxu0 %v516
  %1005 = vmatpush1.msra.mxu0 %v515
  %1006 = vmatprep.subr.mxu0 %v518
  %1007 = vmatpush1.msra.mxu0 %v517
  %1008 = vmatprep.subr.mxu0 %v520
  %1009 = vmatpush1.msra.mxu0 %v519
  %1010 = vmatprep.subr.mxu0 %v522
  %1011 = vmatpush1.msra.mxu0 %v521
  %1012 = vmatprep.subr.mxu0 %v524
  %1013 = vmatpush1.msra.mxu0 %v523
  %1014 = vmatprep.subr.mxu0 %v526
  %1015 = vmatpush1.msra.mxu0 %v525
  %1016 = vmatprep.subr.mxu0 %v528
  %1017 = vmatpush1.msra.mxu0 %v527
  %1018 = vmatprep.subr.mxu0 %v530
  %1019 = vmatpush1.msra.mxu0 %v529
  %1020 = vmatprep.subr.mxu0 %v532
  %1021 = vmatpush1.msra.mxu0 %v531
  %1022 = vmatprep.subr.mxu0 %v534
  %1023 = vmatpush1.msra.mxu0 %v533
  %1024 = vmatprep.subr.mxu0 %v536
  %1025 = vmatpush1.msra.mxu0 %v535
  %1026 = vmatprep.subr.mxu0 %v538
  %1027 = vmatpush1.msra.mxu0 %v537
  %1028 = vmatprep.subr.mxu0 %v540
  %1029 = vmatpush1.msra.mxu0 %v539
  %1030 = vmatprep.subr.mxu0 %v542
  %1031 = vmatpush1.msra.mxu0 %v541
  %1032 = vmatprep.subr.mxu0 %v544
  %1033 = vmatpush1.msra.mxu0 %v543
  %1034 = vmatprep.subr.mxu0 %v546
  %1035 = vmatpush1.msra.mxu0 %v545
  %1036 = vmatprep.subr.mxu0 %v548
  %1037 = vmatpush1.msra.mxu0 %v547
  %1038 = vmatprep.subr.mxu0 %v550
  %1039 = vmatpush1.msra.mxu0 %v549
  %1040 = vmatprep.subr.mxu0 %v552
  %1041 = vmatpush1.msra.mxu0 %v551
  %1042 = vmatprep.subr.mxu0 %v554
  %1043 = vmatpush1.msra.mxu0 %v553
  %1044 = vmatprep.subr.mxu0 %v556
  %1045 = vmatpush1.msra.mxu0 %v555
  %1046 = vmatprep.subr.mxu0 %v558
  %1047 = vmatpush1.msra.mxu0 %v557
  %1048 = vmatprep.subr.mxu0 %v560
  %1049 = vmatpush1.msra.mxu0 %v559
  %1050 = vmatprep.subr.mxu0 %v562
  %1051 = vmatpush1.msra.mxu0 %v561
  %1052 = vmatprep.subr.mxu0 %v564
  %1053 = vmatpush1.msra.mxu0 %v563
  %1054 = vmatprep.subr.mxu0 %v566
  %1055 = vmatpush1.msra.mxu0 %v565
  %1056 = vmatprep.mubr.f32.mxu0 %v254
  %1057 = vmatmul.mubr.f32.gmra.mrb[0].mxu0 %v253
  %v1058 = vpop.f32.mrb[0].mxu0
  %v1059 = vadd.f32 %v886, %v1058
  %v1060 = vpop.f32.mrb[0].mxu0
  %v1061 = vadd.f32 %v888, %v1060
  %1062 = vmatprep.mubr.f32.mxu0 %v261
  %1063 = vmatmul.mubr.f32.gmra.mrb[0].mxu0 %v260
  %v1064 = vpop.f32.mrb[0].mxu0
  %v1065 = vadd.f32 %v892, %v1064
  %v1066 = vpop.f32.mrb[0].mxu0
  %v1067 = vadd.f32 %v894, %v1066
  %1068 = vmatprep.mubr.f32.mxu0 %v268
  %1069 = vmatmul.mubr.f32.gmra.mrb[0].mxu0 %v267
  %v1070 = vpop.f32.mrb[0].mxu0
  %v1071 = vadd.f32 %v898, %v1070
  %v1072 = vpop.f32.mrb[0].mxu0
  %v1073 = vadd.f32 %v900, %v1072
  %1074 = vmatprep.mubr.f32.mxu0 %v275
  %1075 = vmatmul.mubr.f32.gmra.mrb[0].mxu0 %v274
  %v1076 = vpop.f32.mrb[0].mxu0
  %v1077 = vadd.f32 %v904, %v1076
  %v1078 = vpop.f32.mrb[0].mxu0
  %v1079 = vadd.f32 %v906, %v1078
  %1080 = vmatprep.mubr.f32.mxu0 %v282
  %1081 = vmatmul.mubr.f32.gmra.mrb[0].mxu0 %v281
  %v1082 = vpop.f32.mrb[0].mxu0
  %v1083 = vadd.f32 %v910, %v1082
  %v1084 = vpop.f32.mrb[0].mxu0
  %v1085 = vadd.f32 %v912, %v1084
  %1086 = vmatprep.mubr.f32.mxu0 %v289
  %1087 = vmatmul.mubr.f32.gmra.mrb[0].mxu0 %v288
  %v1088 = vpop.f32.mrb[0].mxu0
  %v1089 = vadd.f32 %v916, %v1088
  %v1090 = vpop.f32.mrb[0].mxu0
  %v1091 = vadd.f32 %v918, %v1090
  %1092 = vmatprep.mubr.f32.mxu0 %v296
  %1093 = vmatmul.mubr.f32.gmra.mrb[0].mxu0 %v295
  %v1094 = vpop.f32.mrb[0].mxu0
  %v1095 = vadd.f32 %v922, %v1094
  %v1096 = vpop.f32.mrb[0].mxu0
  %v1097 = vadd.f32 %v924, %v1096
  %1098 = vmatprep.mubr.f32.mxu0 %v303
  %1099 = vmatmul.mubr.f32.gmra.mrb[0].mxu0 %v302
  %v1100 = vpop.f32.mrb[0].mxu0
  %v1101 = vadd.f32 %v928, %v1100
  %v1102 = vpop.f32.mrb[0].mxu0
  %v1103 = vadd.f32 %v930, %v1102
  %1104 = vmatprep.mubr.f32.mxu0 %v310
  %1105 = vmatmul.mubr.f32.gmra.mrb[0].mxu0 %v309
  %v1106 = vpop.f32.mrb[0].mxu0
  %v1107 = vadd.f32 %v934, %v1106
  %v1108 = vpop.f32.mrb[0].mxu0
  %v1109 = vadd.f32 %v936, %v1108
  %1110 = vmatprep.mubr.f32.mxu0 %v317
  %1111 = vmatmul.mubr.f32.gmra.mrb[0].mxu0 %v316
  %v1112 = vpop.f32.mrb[0].mxu0
  %v1113 = vadd.f32 %v940, %v1112
  %v1114 = vpop.f32.mrb[0].mxu0
  %v1115 = vadd.f32 %v942, %v1114
  %1116 = vmatprep.mubr.f32.mxu0 %v324
  %1117 = vmatmul.mubr.f32.gmra.mrb[0].mxu0 %v323
  %v1118 = vpop.f32.mrb[0].mxu0
  %v1119 = vadd.f32 %v946, %v1118
  %v1120 = vpop.f32.mrb[0].mxu0
  %v1121 = vadd.f32 %v948, %v1120
  %1122 = vmatprep.mubr.f32.mxu0 %v331
  %1123 = vmatmul.mubr.f32.gmra.mrb[0].mxu0 %v330
  %v1124 = vpop.f32.mrb[0].mxu0
  %v1125 = vadd.f32 %v952, %v1124
  %v1126 = vpop.f32.mrb[0].mxu0
  %v1127 = vadd.f32 %v954, %v1126
  %1128 = vmatprep.mubr.f32.mxu0 %v338
  %1129 = vmatmul.mubr.f32.gmra.mrb[0].mxu0 %v337
  %v1130 = vpop.f32.mrb[0].mxu0
  %v1131 = vadd.f32 %v958, %v1130
  %v1132 = vpop.f32.mrb[0].mxu0
  %v1133 = vadd.f32 %v960, %v1132
  %1134 = vmatprep.mubr.f32.mxu0 %v345
  %1135 = vmatmul.mubr.f32.gmra.mrb[0].mxu0 %v344
  %v1136 = vpop.f32.mrb[0].mxu0
  %v1137 = vadd.f32 %v964, %v1136
  %v1138 = vpop.f32.mrb[0].mxu0
  %v1139 = vadd.f32 %v966, %v1138
  %1140 = vmatprep.mubr.f32.mxu0 %v352
  %1141 = vmatmul.mubr.f32.gmra.mrb[0].mxu0 %v351
  %v1142 = vpop.f32.mrb[0].mxu0
  %v1143 = vadd.f32 %v970, %v1142
  %v1144 = vpop.f32.mrb[0].mxu0
  %v1145 = vadd.f32 %v972, %v1144
  %1146 = vmatprep.mubr.f32.mxu0 %v359
  %1147 = vmatmul.mubr.f32.gmra.mrb[0].mxu0 %v358
  %v1148 = vpop.f32.mrb[0].mxu0
  %v1149 = vadd.f32 %v976, %v1148
  %v1150 = vpop.f32.mrb[0].mxu0
  %v1151 = vadd.f32 %v978, %v1150
  %1152 = vmatprep.mubr.f32.mxu0 %v366
  %1153 = vmatmul.mubr.f32.gmra.mrb[0].mxu0 %v365
  %v1154 = vpop.f32.mrb[0].mxu0
  %v1155 = vadd.f32 %v982, %v1154
  %v1156 = vpop.f32.mrb[0].mxu0
  %v1157 = vadd.f32 %v984, %v1156
  %1158 = vmatprep.mubr.f32.mxu0 %v373
  %1159 = vmatmul.mubr.f32.gmra.mrb[0].mxu0 %v372
  %v1160 = vpop.f32.mrb[0].mxu0
  %v1161 = vadd.f32 %v988, %v1160
  %v1162 = vpop.f32.mrb[0].mxu0
  %v1163 = vadd.f32 %v990, %v1162
  %1164 = vdwg.mxu0
  %1165 = vmatprep.subr.mxu0 %v568
  %1166 = vmatpush1.msra.mxu0 %v567
  %1167 = vmatprep.subr.mxu0 %v570
  %1168 = vmatpush1.msra.mxu0 %v569
  %1169 = vmatprep.subr.mxu0 %v572
  %1170 = vmatpush1.msra.mxu0 %v571
  %1171 = vmatprep.subr.mxu0 %v574
  %1172 = vmatpush1.msra.mxu0 %v573
  %1173 = vmatprep.subr.mxu0 %v576
  %1174 = vmatpush1.msra.mxu0 %v575
  %1175 = vmatprep.subr.mxu0 %v578
  %1176 = vmatpush1.msra.mxu0 %v577
  %1177 = vmatprep.subr.mxu0 %v580
  %1178 = vmatpush1.msra.mxu0 %v579
  %1179 = vmatprep.subr.mxu0 %v582
  %1180 = vmatpush1.msra.mxu0 %v581
  %1181 = vmatprep.subr.mxu0 %v584
  %1182 = vmatpush1.msra.mxu0 %v583
  %1183 = vmatprep.subr.mxu0 %v586
  %1184 = vmatpush1.msra.mxu0 %v585
  %1185 = vmatprep.subr.mxu0 %v588
  %1186 = vmatpush1.msra.mxu0 %v587
  %1187 = vmatprep.subr.mxu0 %v590
  %1188 = vmatpush1.msra.mxu0 %v589
  %1189 = vmatprep.subr.mxu0 0.0
  %1190 = vmatpush1.msra.mxu0 0.0
  %1191 = vmatprep.subr.mxu0 0.0
  %1192 = vmatpush1.msra.mxu0 0.0
  %1193 = vmatprep.subr.mxu0 0.0
  %1194 = vmatpush1.msra.mxu0 0.0
  %1195 = vmatprep.subr.mxu0 0.0
  %1196 = vmatpush1.msra.mxu0 0.0
  %1197 = vmatprep.subr.mxu0 0.0
  %1198 = vmatpush1.msra.mxu0 0.0
  %1199 = vmatprep.subr.mxu0 0.0
  %1200 = vmatpush1.msra.mxu0 0.0
  %1201 = vmatprep.subr.mxu0 0.0
  %1202 = vmatpush1.msra.mxu0 0.0
  %1203 = vmatprep.subr.mxu0 0.0
  %1204 = vmatpush1.msra.mxu0 0.0
  %1205 = vmatprep.subr.mxu0 0.0
  %1206 = vmatpush1.msra.mxu0 0.0
  %1207 = vmatprep.subr.mxu0 0.0
  %1208 = vmatpush1.msra.mxu0 0.0
  %1209 = vmatprep.subr.mxu0 0.0
  %1210 = vmatpush1.msra.mxu0 0.0
  %1211 = vmatprep.subr.mxu0 0.0
  %1212 = vmatpush1.msra.mxu0 0.0
  %1213 = vmatprep.subr.mxu0 0.0
  %1214 = vmatpush1.msra.mxu0 0.0
  %1215 = vmatprep.subr.mxu0 0.0
  %1216 = vmatpush1.msra.mxu0 0.0
  %1217 = vmatprep.subr.mxu0 0.0
  %1218 = vmatpush1.msra.mxu0 0.0
  %1219 = vmatprep.subr.mxu0 0.0
  %1220 = vmatpush1.msra.mxu0 0.0
  %1221 = vmatprep.subr.mxu0 0.0
  %1222 = vmatpush1.msra.mxu0 0.0
  %1223 = vmatprep.subr.mxu0 0.0
  %1224 = vmatpush1.msra.mxu0 0.0
  %1225 = vmatprep.subr.mxu0 0.0
  %1226 = vmatpush1.msra.mxu0 0.0
  %1227 = vmatprep.subr.mxu0 0.0
  %1228 = vmatpush1.msra.mxu0 0.0
  %1229 = vmatprep.mubr.f32.mxu0 0.0
  %1230 = vmatmul.mubr.f32.gmra.mrb[0].mxu0 %v593
  %v1231 = vpop.f32.mrb[0].mxu0
  %v1232 = vadd.f32 %v1059, %v1231
  %v1233 = vpop.f32.mrb[0].mxu0
  %v1234 = vadd.f32 %v1061, %v1233
  %1235 = vmatprep.mubr.f32.mxu0 0.0
  %1236 = vmatmul.mubr.f32.gmra.mrb[0].mxu0 %v596
  %v1237 = vpop.f32.mrb[0].mxu0
  %v1238 = vadd.f32 %v1065, %v1237
  %v1239 = vpop.f32.mrb[0].mxu0
  %v1240 = vadd.f32 %v1067, %v1239
  %1241 = vmatprep.mubr.f32.mxu0 0.0
  %1242 = vmatmul.mubr.f32.gmra.mrb[0].mxu0 %v599
  %v1243 = vpop.f32.mrb[0].mxu0
  %v1244 = vadd.f32 %v1071, %v1243
  %v1245 = vpop.f32.mrb[0].mxu0
  %v1246 = vadd.f32 %v1073, %v1245
  %1247 = vmatprep.mubr.f32.mxu0 0.0
  %1248 = vmatmul.mubr.f32.gmra.mrb[0].mxu0 %v602
  %v1249 = vpop.f32.mrb[0].mxu0
  %v1250 = vadd.f32 %v1077, %v1249
  %v1251 = vpop.f32.mrb[0].mxu0
  %v1252 = vadd.f32 %v1079, %v1251
  %1253 = vmatprep.mubr.f32.mxu0 0.0
  %1254 = vmatmul.mubr.f32.gmra.mrb[0].mxu0 %v605
  %v1255 = vpop.f32.mrb[0].mxu0
  %v1256 = vadd.f32 %v1083, %v1255
  %v1257 = vpop.f32.mrb[0].mxu0
  %v1258 = vadd.f32 %v1085, %v1257
  %1259 = vmatprep.mubr.f32.mxu0 0.0
  %1260 = vmatmul.mubr.f32.gmra.mrb[0].mxu0 %v608
  %v1261 = vpop.f32.mrb[0].mxu0
  %v1262 = vadd.f32 %v1089, %v1261
  %v1263 = vpop.f32.mrb[0].mxu0
  %v1264 = vadd.f32 %v1091, %v1263
  %1265 = vmatprep.mubr.f32.mxu0 0.0
  %1266 = vmatmul.mubr.f32.gmra.mrb[0].mxu0 %v611
  %v1267 = vpop.f32.mrb[0].mxu0
  %v1268 = vadd.f32 %v1095, %v1267
  %v1269 = vpop.f32.mrb[0].mxu0
  %v1270 = vadd.f32 %v1097, %v1269
  %1271 = vmatprep.mubr.f32.mxu0 0.0
  %1272 = vmatmul.mubr.f32.gmra.mrb[0].mxu0 %v614
  %v1273 = vpop.f32.mrb[0].mxu0
  %v1274 = vadd.f32 %v1101, %v1273
  %v1275 = vpop.f32.mrb[0].mxu0
  %v1276 = vadd.f32 %v1103, %v1275
  %1277 = vmatprep.mubr.f32.mxu0 0.0
  %1278 = vmatmul.mubr.f32.gmra.mrb[0].mxu0 %v617
  %v1279 = vpop.f32.mrb[0].mxu0
  %v1280 = vadd.f32 %v1107, %v1279
  %v1281 = vpop.f32.mrb[0].mxu0
  %v1282 = vadd.f32 %v1109, %v1281
  %1283 = vmatprep.mubr.f32.mxu0 0.0
  %1284 = vmatmul.mubr.f32.gmra.mrb[0].mxu0 %v620
  %v1285 = vpop.f32.mrb[0].mxu0
  %v1286 = vadd.f32 %v1113, %v1285
  %v1287 = vpop.f32.mrb[0].mxu0
  %v1288 = vadd.f32 %v1115, %v1287
  %1289 = vmatprep.mubr.f32.mxu0 0.0
  %1290 = vmatmul.mubr.f32.gmra.mrb[0].mxu0 %v623
  %v1291 = vpop.f32.mrb[0].mxu0
  %v1292 = vadd.f32 %v1119, %v1291
  %v1293 = vpop.f32.mrb[0].mxu0
  %v1294 = vadd.f32 %v1121, %v1293
  %1295 = vmatprep.mubr.f32.mxu0 0.0
  %1296 = vmatmul.mubr.f32.gmra.mrb[0].mxu0 %v626
  %v1297 = vpop.f32.mrb[0].mxu0
  %v1298 = vadd.f32 %v1125, %v1297
  %v1299 = vpop.f32.mrb[0].mxu0
  %v1300 = vadd.f32 %v1127, %v1299
  %1301 = vmatprep.mubr.f32.mxu0 0.0
  %1302 = vmatmul.mubr.f32.gmra.mrb[0].mxu0 %v629
  %v1303 = vpop.f32.mrb[0].mxu0
  %v1304 = vadd.f32 %v1131, %v1303
  %v1305 = vpop.f32.mrb[0].mxu0
  %v1306 = vadd.f32 %v1133, %v1305
  %1307 = vmatprep.mubr.f32.mxu0 0.0
  %1308 = vmatmul.mubr.f32.gmra.mrb[0].mxu0 %v632
  %v1309 = vpop.f32.mrb[0].mxu0
  %v1310 = vadd.f32 %v1137, %v1309
  %v1311 = vpop.f32.mrb[0].mxu0
  %v1312 = vadd.f32 %v1139, %v1311
  %1313 = vmatprep.mubr.f32.mxu0 0.0
  %1314 = vmatmul.mubr.f32.gmra.mrb[0].mxu0 %v635
  %v1315 = vpop.f32.mrb[0].mxu0
  %v1316 = vadd.f32 %v1143, %v1315
  %v1317 = vpop.f32.mrb[0].mxu0
  %v1318 = vadd.f32 %v1145, %v1317
  %1319 = vmatprep.mubr.f32.mxu0 0.0
  %1320 = vmatmul.mubr.f32.gmra.mrb[0].mxu0 %v638
  %v1321 = vpop.f32.mrb[0].mxu0
  %v1322 = vadd.f32 %v1149, %v1321
  %v1323 = vpop.f32.mrb[0].mxu0
  %v1324 = vadd.f32 %v1151, %v1323
  %1325 = vmatprep.mubr.f32.mxu0 0.0
  %1326 = vmatmul.mubr.f32.gmra.mrb[0].mxu0 %v641
  %v1327 = vpop.f32.mrb[0].mxu0
  %v1328 = vadd.f32 %v1155, %v1327
  %v1329 = vpop.f32.mrb[0].mxu0
  %v1330 = vadd.f32 %v1157, %v1329
  %1331 = vmatprep.mubr.f32.mxu0 0.0
  %1332 = vmatmul.mubr.f32.gmra.mrb[0].mxu0 %v644
  %v1333 = vpop.f32.mrb[0].mxu0
  %v1334 = vadd.f32 %v1161, %v1333
  %v1335 = vpop.f32.mrb[0].mxu0
  %v1336 = vadd.f32 %v1163, %v1335
  %1337 = vdwg.mxu0
  %1338 = vst [vmem:[%s3] sm:$0xff] %v1232
  %vm1339 = vcmask 556032
  %1340 = vst.msk [vmem:[%s3 + $0x8] sm:$0xff] %vm1339, %v1234
  %1341 = vst [vmem:[%s3 + $0x10] sm:$0xff] %v1238
  %1342 = vst.msk [vmem:[%s3 + $0x18] sm:$0xff] %vm1339, %v1240
  %1343 = vst [vmem:[%s3 + $0x20] sm:$0xff] %v1244
  %1344 = vst.msk [vmem:[%s3 + $0x28] sm:$0xff] %vm1339, %v1246
  %1345 = vst [vmem:[%s3 + $0x30] sm:$0xff] %v1250
  %1346 = vst.msk [vmem:[%s3 + $0x38] sm:$0xff] %vm1339, %v1252
  %1347 = vst [vmem:[%s3 + $0x40] sm:$0xff] %v1256
  %1348 = vst.msk [vmem:[%s3 + $0x48] sm:$0xff] %vm1339, %v1258
  %1349 = vst [vmem:[%s3 + $0x50] sm:$0xff] %v1262
  %1350 = vst.msk [vmem:[%s3 + $0x58] sm:$0xff] %vm1339, %v1264
  %1351 = vst [vmem:[%s3 + $0x60] sm:$0xff] %v1268
  %1352 = vst.msk [vmem:[%s3 + $0x68] sm:$0xff] %vm1339, %v1270
  %1353 = vst [vmem:[%s3 + $0x70] sm:$0xff] %v1274
  %1354 = vst.msk [vmem:[%s3 + $0x78] sm:$0xff] %vm1339, %v1276
  %1355 = vst [vmem:[%s3 + $0x80] sm:$0xff] %v1280
  %1356 = vst.msk [vmem:[%s3 + $0x88] sm:$0xff] %vm1339, %v1282
  %1357 = vst [vmem:[%s3 + $0x90] sm:$0xff] %v1286
  %1358 = vst.msk [vmem:[%s3 + $0x98] sm:$0xff] %vm1339, %v1288
  %1359 = vst [vmem:[%s3 + $0xa0] sm:$0xff] %v1292
  %1360 = vst.msk [vmem:[%s3 + $0xa8] sm:$0xff] %vm1339, %v1294
  %1361 = vst [vmem:[%s3 + $0xb0] sm:$0xff] %v1298
  %1362 = vst.msk [vmem:[%s3 + $0xb8] sm:$0xff] %vm1339, %v1300
  %1363 = vst [vmem:[%s3 + $0xc0] sm:$0xff] %v1304
  %1364 = vst.msk [vmem:[%s3 + $0xc8] sm:$0xff] %vm1339, %v1306
  %1365 = vst [vmem:[%s3 + $0xd0] sm:$0xff] %v1310
  %1366 = vst.msk [vmem:[%s3 + $0xd8] sm:$0xff] %vm1339, %v1312
  %1367 = vst [vmem:[%s3 + $0xe0] sm:$0xff] %v1316
  %1368 = vst.msk [vmem:[%s3 + $0xe8] sm:$0xff] %vm1339, %v1318
  %1369 = vst [vmem:[%s3 + $0xf0] sm:$0xff] %v1322
  %1370 = vst.msk [vmem:[%s3 + $0xf8] sm:$0xff] %vm1339, %v1324
  %1371 = vst [vmem:[%s3 + $0x100] sm:$0xff] %v1328
  %1372 = vst.msk [vmem:[%s3 + $0x108] sm:$0xff] %vm1339, %v1330
  %1373 = vst [vmem:[%s3 + $0x110] sm:$0xff] %v1334
  %1374 = vst.msk [vmem:[%s3 + $0x118] sm:$0xff] %vm1339, %v1336
  // Predicated region
  $region14: #{mul_conv2d_1x1.1} parent=0 // pred_check
    _
  $region15: #{mul_conv2d_1x1.1} parent=0 // pred_check_branch
    %1376 = sbr.rel (0) target = $region17
  $region16: #{mul_conv2d_1x1.1} parent=0 // pred_region
    _
  $region17: #{mul_conv2d_1x1.1} parent=0 // pred_fallthru
    _
  // Predicated region
  $region18: #{mul_conv2d_1x1.1} parent=0 // pred_check
    _
  $region19: #{mul_conv2d_1x1.1} parent=0 // pred_check_branch
    %1378 = sbr.rel (0) target = $region21
  $region20: #{mul_conv2d_1x1.1} parent=0 // pred_region
    _
  $region21: #{mul_conv2d_1x1.1} parent=0 // pred_fallthru
    _

</llo_original>
